<compile_context>
chip_gen: v7x
topology: tpu7x:2x2x1
jax: 0.10.0
libtpu: 0.0.40
codegen_flags: <defaults>
</compile_context>

<pallas_src>
import jax
import jax.numpy as jnp
from jax.experimental import pallas as pl
from jax.experimental.pallas import tpu as pltpu

_LANE = 128
_SUBLANE = 8


def _drop_path_kernel(scale_ref, x_ref, o_ref):
    """out = x * scale, per-row (per-sample) scale already in x.dtype."""
    o_ref[...] = x_ref[...] * scale_ref[...]


def _drop_path_residual_kernel(scale_ref, x_ref, res_ref, o_ref):
    """Fused residual add: out = residual + x * scale."""
    o_ref[...] = res_ref[...] + x_ref[...] * scale_ref[...]


def _vmem_budget_bytes():
    """Budget (bytes) for the big double-buffered input/output tiles, per chip gen."""
    try:
        kind = jax.devices()[0].device_kind.lower()
    except Exception:
        kind = ""
    if "v5" in kind:
        return 8 << 20    # stay under v5e's 16 MiB scoped-VMEM default
    if "v6" in kind:
        return 32 << 20   # 128 MiB VMEM -> ~8 MiB payload tiles
    if "v7" in kind:
        return 24 << 20   # v7x has only 64 MiB VMEM (32 MiB scoped default)
    return 16 << 20


def _pick_tiles(B, F, itemsize, target_tile_bytes):
    """Lane/sublane-dense (TB, TF). F must already be a multiple of 128."""
    max_elems = max(target_tile_bytes // itemsize, _SUBLANE * _LANE)
    # Lane axis: as wide as possible -> unmasked, lane-dense vst on the output.
    TF = min(F, max(_LANE, ((max_elems // _SUBLANE) // _LANE) * _LANE))
    # Sublane axis: multiple of 8 (or the full extent when B <= 8).
    if B <= _SUBLANE:
        TB = B
    else:
        rows = max(_SUBLANE, ((max_elems // TF) // _SUBLANE) * _SUBLANE)
        TB = min(rows, ((B + _SUBLANE - 1) // _SUBLANE) * _SUBLANE)
    return TB, TF


def drop_path(x, drop_prob, training, *, key=None, seed=0, residual=None):
    """Pallas-backed drop_path.

    If `residual` is given, returns `residual + drop_path(x)` fused in one kernel.
    Identity (plus residual) when not training or drop_prob in (None, 0).
    """
    if (not training) or (drop_prob is None) or (drop_prob == 0.0):
        return x if residual is None else residual + x

    keep_prob = 1.0 - float(drop_prob)
    # TODO(synk): drop_prob == 1.0 yields NaN (0 * inf), same as the torch reference.

    B = x.shape[0]
    x_flat = x.reshape(B, -1)                     # (B, F) — one sample per row
    F0 = x_flat.shape[1]
    pad = (-F0) % _LANE
    if pad:                                       # keep output stores lane-dense
        x_flat = jnp.pad(x_flat, ((0, 0), (0, pad)))
    F = x_flat.shape[1]

    itemsize = jnp.dtype(x.dtype).itemsize
    n_big = 2 if residual is None else 3          # big tensors streamed through VMEM
    budget = _vmem_budget_bytes()
    target_tile_bytes = max(budget // (2 * n_big), _SUBLANE * _LANE * itemsize)
    TB, TF = _pick_tiles(B, F, itemsize, target_tile_bytes)

    # Per-sample keep/drop decision (one tiny (B,) op), pre-cast to x.dtype so
    # the kernel is a single vmul per element.
    if key is None:
        key = jax.random.PRNGKey(seed)
    u = jax.random.uniform(key, (B,), dtype=jnp.float32)
    mask = jnp.floor(jnp.float32(keep_prob) + u)              # 0. or 1.
    scale = (mask * jnp.float32(1.0 / keep_prob)).astype(x.dtype).reshape(B, 1)

    # Long F-tile axis leads so v7x megacore shards it across both TensorCores.
    grid = (pl.cdiv(F, TF), pl.cdiv(B, TB))
    scale_spec = pl.BlockSpec((TB, 1), lambda j, i: (i, 0))
    tile_spec = pl.BlockSpec((TB, TF), lambda j, i: (i, j))

    vmem_limit = int(2 * n_big * TB * TF * itemsize + (4 << 20))
    cparams = pltpu.CompilerParams(
        dimension_semantics=("parallel", "parallel"),
        vmem_limit_bytes=vmem_limit,
    )
    cost = pl.CostEstimate(
        flops=n_big * B * F,
        transcendentals=0,
        bytes_accessed=n_big * B * F * itemsize,
    )

    if residual is None:
        out_flat = pl.pallas_call(
            _drop_path_kernel,
            out_shape=jax.ShapeDtypeStruct((B, F), x.dtype),
            grid=grid,
            in_specs=[scale_spec, tile_spec],
            out_specs=tile_spec,
            compiler_params=cparams,
            cost_estimate=cost,
        )(scale, x_flat)
    else:
        res_flat = residual.astype(x.dtype).reshape(B, -1)
        if pad:
            res_flat = jnp.pad(res_flat, ((0, 0), (0, pad)))
        out_flat = pl.pallas_call(
            _drop_path_residual_kernel,
            out_shape=jax.ShapeDtypeStruct((B, F), x.dtype),
            grid=grid,
            in_specs=[scale_spec, tile_spec, tile_spec],
            out_specs=tile_spec,
            compiler_params=cparams,
            cost_estimate=cost,
        )(scale, x_flat, res_flat)

    if pad:
        out_flat = out_flat[:, :F0]
    return out_flat.reshape(x.shape)


class DropPath:
    """Drop paths (Stochastic Depth) per sample — JAX/Pallas port of the torch module."""

    def __init__(self, drop_prob=None):
        self.drop_prob = drop_prob
        self.training = True

    def __call__(self, x, key=None, seed=0, residual=None):
        return drop_path(x, self.drop_prob, self.training,
                         key=key, seed=seed, residual=residual)

    def extra_repr(self) -> str:
        return "p={}".format(self.drop_prob)


if __name__ == "__main__":
    root = jax.random.PRNGKey(0)
    kx, kr, kd = jax.random.split(root, 3)

    B, C, H, W = 2, 4, 16, 16
    x = jax.random.normal(kx, (B, C, H, W), dtype=jnp.float32)
    keep_prob = 0.5

    # Training mode with drop_prob=0.5: per-sample keep/drop with 1/keep_prob rescale.
    mod = DropPath(drop_prob=0.5)
    y = jax.block_until_ready(mod(x, key=kd))
    assert y.shape == x.shape and y.dtype == x.dtype
    for b in range(B):
        yb = y[b]
        is_dropped = bool(jnp.all(yb == 0.0))
        is_kept = bool(jnp.allclose(yb, x[b] / keep_prob, rtol=1e-6, atol=1e-6))
        assert is_dropped or is_kept, "sample is neither fully dropped nor fully kept"

    # Fused residual path (same key -> same mask) must equal residual + standalone output.
    res = jax.random.normal(kr, (B, C, H, W), dtype=jnp.float32)
    y_fused = jax.block_until_ready(mod(x, key=kd, residual=res))
    assert bool(jnp.allclose(y_fused, res + y, rtol=1e-6, atol=1e-6))

    # Ragged feature dim (F % 128 != 0) exercises the lane-padding path.
    xr = jax.random.normal(kx, (4, 3, 10), dtype=jnp.float32)
    yr = jax.block_until_ready(drop_path(xr, 0.5, True, key=kd))
    assert yr.shape == xr.shape
    for b in range(4):
        yb = yr[b]
        is_dropped = bool(jnp.all(yb == 0.0))
        is_kept = bool(jnp.allclose(yb, xr[b] / keep_prob, rtol=1e-6, atol=1e-6))
        assert is_dropped or is_kept

    # Eval mode (training=False) must be identity.
    mod.training = False
    assert bool(jnp.array_equal(jax.block_until_ready(mod(x)), x))

    # drop_prob=None / 0.0 must be identity even in training mode.
    mod2 = DropPath(drop_prob=None)
    assert bool(jnp.array_equal(jax.block_until_ready(mod2(x)), x))

    print("KERNEL_OK")
</pallas_src>

<mosaic_0001>
module attributes {stable_mosaic.version = 11 : i64} {
  func.func @_drop_path_kernel(%arg0: i32, %arg1: i32, %arg2: memref<2x1xf32, #tpu.memory_space<vmem>>, %arg3: memref<2x1024xf32, #tpu.memory_space<vmem>>, %arg4: memref<2x1024xf32, #tpu.memory_space<vmem>>) attributes {dimension_semantics = [#tpu.dimension_semantics<parallel>, #tpu.dimension_semantics<parallel>], iteration_bounds = array<i64: 1, 1>, scalar_prefetch = 0 : i64, scratch_operands = 0 : i64, tpu.core_type = #tpu.core_type<tc>, window_params = [{transform_indices = @transform_0, window_bounds = array<i64: 2, 1>}, {transform_indices = @transform_1, window_bounds = array<i64: 2, 1024>}, {transform_indices = @transform_2, window_bounds = array<i64: 2, 1024>}]} {
    %c0 = arith.constant 0 : index
    %c0_0 = arith.constant 0 : index
    %0 = vector.load %arg3[%c0, %c0_0] : memref<2x1024xf32, #tpu.memory_space<vmem>>, vector<2x1024xf32>
    %c0_1 = arith.constant 0 : index
    %c0_2 = arith.constant 0 : index
    %1 = vector.load %arg2[%c0_1, %c0_2] : memref<2x1xf32, #tpu.memory_space<vmem>>, vector<2x1xf32>
    %2 = vector.broadcast %1 : vector<2x1xf32> to vector<2x1024xf32>
    %3 = arith.mulf %0, %2 : vector<2x1024xf32>
    %c0_3 = arith.constant 0 : index
    %c0_4 = arith.constant 0 : index
    %4 = vector.load %arg4[%c0_3, %c0_4] : memref<2x1024xf32, #tpu.memory_space<vmem>>, vector<2x1024xf32>
    tpu.vector_store %arg4[%c0_3, %c0_4], %3 {strides = array<i32>} : memref<2x1024xf32, #tpu.memory_space<vmem>>, vector<2x1024xf32>,
    return
  }
  func.func @transform_0(%arg0: i32, %arg1: i32) -> (i32, i32) {
    %c0_i32 = arith.constant 0 : i32
    %c0_i32_0 = arith.constant 0 : i32
    return %arg1, %c0_i32 : i32, i32
  }
  func.func @transform_1(%arg0: i32, %arg1: i32) -> (i32, i32) {
    %c0_i32 = arith.constant 0 : i32
    return %arg1, %arg0 : i32, i32
  }
  func.func @transform_2(%arg0: i32, %arg1: i32) -> (i32, i32) {
    %c0_i32 = arith.constant 0 : i32
    return %arg1, %arg0 : i32, i32
  }
}

</mosaic_0001>

<llo_original>
// kernel: tpu_custom_call.1
$region0: #{tpu_custom_call.1}
  #allocation0 [shape = 'u32[]', space=smem, size = 0x4, offset = 0x4, fixed_abs, tag = 'smem constant byte address 0x4 - core index']
  #allocation1 [shape = 'u32[144,128]{1,0:T(1,128)}', space=vmem, size = 0x12000, scoped, tag = 'internal scratch']
  %s0 = inlined_call_operand.vmem [shape: f32[2,1], index: 0, kind: input, shape index: {}]
  %s1 = inlined_call_operand.hbm [shape: f32[2,1024], index: 1, kind: input, shape index: {}]
  %s2 = inlined_call_operand.hbm [shape: f32[2,1024], index: 2, kind: output, shape index: {}]
  %s3 = sld [smem:[#allocation0]]
  $region22: #{tpu_custom_call.1} parent=0
    _
  %s5 = ssub.s32 1, %s3
  %s6 = scalar_select 0, %s5, %s3
  $region1: #{tpu_custom_call.1} parent=0
    #allocation2 [shape = 'u8[8192]{0}', space=vmem, size = 0x2000, scoped, tag = 'input window, operand 1, single buffered']
    #allocation3 [shape = 's32[1]{0}', space=sflag, size = 0x4, scoped, tag = 'scoped memory for tpu_custom_call.1']
    #allocation4 [shape = 's32[1]{0}', space=sflag, size = 0x4, scoped, tag = 'scoped memory for tpu_custom_call.1']
    #allocation5 [shape = 'u8[8192]{0}', space=vmem, size = 0x2000, scoped, tag = 'output window, operand 0, single buffered']
    %7 = vsyncpa [#allocation3], 0
    %8 = vsyncpa [#allocation4], 0
    // Predicated region
    $region2: #{tpu_custom_call.1} parent=1 // pred_check
      _
    $region3: #{tpu_custom_call.1} parent=1 // pred_check_branch
      %10 = sbr.rel (0) target = $region5
    $region4: #{tpu_custom_call.1} parent=1 // pred_region
      _
    $region5: #{tpu_custom_call.1} parent=1 // pred_fallthru
      _
    // Predicated region
    $region6: #{tpu_custom_call.1} parent=1 // pred_check
      _
    $region7: #{tpu_custom_call.1} parent=1 // pred_check_branch
      %12 = sbr.rel (0) target = $region9
    $region8: #{tpu_custom_call.1} parent=1 // pred_region
      %s14 = ssub.s32 256, 256
      %15 = vsyncadd [#allocation3], %s14
      %s17 = sshll.u32 [#allocation2], 4
      %s18 = int_to_ptr.vmem [resolvable:$true] %s17
      %20 = dma.hbm_to_vmem [thread:$0]  %s1, 256, %s18, [#allocation3]
    $region9: #{tpu_custom_call.1} parent=1 // pred_fallthru
      _
    // Predicated region
    $region10: #{tpu_custom_call.1} parent=1 // pred_check
      _
    $region11: #{tpu_custom_call.1} parent=1 // pred_check_branch
      %22 = sbr.rel (0) target = $region13
    $region12: #{tpu_custom_call.1} parent=1 // pred_region
      %23 = dma.done [#allocation3], 256
    $region13: #{tpu_custom_call.1} parent=1 // pred_fallthru
      _
    %v24 = vld [vmem:[#allocation2] sm:$0xff]
    %v25 = vld [vmem:[#allocation2 + $0x8] sm:$0xff]
    %v26 = vld [vmem:[%s0] sm:$0x3]
    %28 = vset.pattern.permute.xlu0 0
    %29 = vperm.xlu0 %28, %v26
    %v30 = vpop.permute.xlu0 %29
    %v32 = vunpack.c.l.s4 269488144
    %v33 = vunpack.c.0.s8 %v32
    %v34 = vlaneseq
    %v35 = vshrl.u32 %v34, 7
    %v36 = vsub.s32 %v33, %v35
    %v37 = vrot.slane %v30, %v36
    %v39 = vmul.f32 %v24, %v37
    %v40 = vmul.f32 %v25, %v37
    %41 = vst [vmem:[#allocation5] sm:$0xff] %v39
    %42 = vst [vmem:[#allocation5 + $0x8] sm:$0xff] %v40
    // Predicated region
    $region14: #{tpu_custom_call.1} parent=1 // pred_check
      _
    $region15: #{tpu_custom_call.1} parent=1 // pred_check_branch
      %44 = sbr.rel (0) target = $region17
    $region16: #{tpu_custom_call.1} parent=1 // pred_region
      %s46 = ssub.s32 256, 256
      %47 = vsyncadd [#allocation4], %s46
      %s49 = sshll.u32 [#allocation5], 4
      %s50 = int_to_ptr.vmem [resolvable:$true] %s49
      %52 = dma.vmem_to_hbm [thread:$0]  %s50, 256, %s2, [#allocation4]
    $region17: #{tpu_custom_call.1} parent=1 // pred_fallthru
      _
    // Predicated region
    $region18: #{tpu_custom_call.1} parent=1 // pred_check
      _
    $region19: #{tpu_custom_call.1} parent=1 // pred_check_branch
      %54 = sbr.rel (0) target = $region21
    $region20: #{tpu_custom_call.1} parent=1 // pred_region
      %55 = dma.done [#allocation4], 256
    $region21: #{tpu_custom_call.1} parent=1 // pred_fallthru
      _
    %56 = vsyncpa [#allocation3], 1
    %57 = vsyncpa [#allocation4], 1

</llo_original>
